<compile_context>
chip_gen: v7x
topology: tpu7x:2x2x1
jax: 0.10.0
libtpu: 0.0.40
codegen_flags: <defaults>
</compile_context>

<pallas_src>
import functools

import jax
import jax.numpy as jnp
from jax.experimental import pallas as pl
from jax.experimental.pallas import tpu as pltpu


def _conv1x1_kernel(x_ref, w_ref, b_ref, o_ref, *, precision):
    # x_ref: (Cin, TP), w_ref: (Cout, Cin), b_ref: (Cout, 1), o_ref: (Cout, TP)
    acc = jnp.dot(
        w_ref[...], x_ref[...],
        preferred_element_type=jnp.float32,
        precision=precision,
    )
    o_ref[...] = (acc + b_ref[...].astype(jnp.float32)).astype(o_ref.dtype)


def _round_down_128(v):
    return max((int(v) // 128) * 128, 128)


def conv1x1_pallas(x_nchw, weight, bias, *, compute_dtype=None):
    """1x1 conv, stride 1, no padding  (== BboxHead_stitch.forward).

    x_nchw: (N, Cin, H, W)
    weight: (Cout, Cin, 1, 1)   (PyTorch conv weight layout)
    bias:   (Cout,)
    compute_dtype: optional (e.g. jnp.bfloat16) to halve HBM traffic for x/W;
                   accumulation stays f32 and output keeps x's dtype.
    returns (N, Cout, H, W)
    """
    N, Cin, H, W = x_nchw.shape
    Cout = weight.shape[0]
    HW = H * W
    out_dtype = x_nchw.dtype

    # Glue (all free -- no transposes, no pads):
    x_3d = x_nchw.reshape(N, Cin, HW)          # NCHW -> (N, Cin, HW)
    w_mat = weight.reshape(Cout, Cin)          # out = W @ x
    b_col = bias.reshape(Cout, 1).astype(jnp.float32)

    if compute_dtype is not None:
        x_3d = x_3d.astype(compute_dtype)
        w_mat = w_mat.astype(compute_dtype)

    in_itemsize = jnp.dtype(x_3d.dtype).itemsize
    out_itemsize = jnp.dtype(out_dtype).itemsize

    # ---- generation-aware VMEM budget -------------------------------------
    try:
        vmem_cap = int(pltpu.get_tpu_info().vmem_capacity_bytes)
    except Exception:  # no TPU / query unavailable: be conservative (v7x)
        vmem_cap = 64 * 1024 * 1024
    if vmem_cap <= 64 * 1024 * 1024:
        tile_budget = 36 * 1024 * 1024     # v7x: 64 MiB physical, big headroom
    else:
        tile_budget = 96 * 1024 * 1024     # v5e/v6e: 128 MiB physical

    # Weights + bias are DMA'd exactly once (constant index_map, Buffered(1)).
    w_bytes = Cout * Cin * in_itemsize + Cout * 4

    # ---- pixel-tile selection ----------------------------------------------
    # Memory-bound: target ~4 MiB per x tile and per out tile, bounded by the
    # double-buffered VMEM budget.  Always a multiple of 128 lanes unless the
    # block is the full HW extent (ragged last block handled by Pallas).
    per_tile_target = 4 * 1024 * 1024
    row_bytes = max(Cin * in_itemsize, Cout * out_itemsize)
    tp_target = max(per_tile_target // row_bytes, 128)
    tp_budget = max(
        (tile_budget - w_bytes) // (2 * (Cin * in_itemsize + Cout * out_itemsize)),
        128,
    )

    if HW < 256:
        tp_eff = HW                        # single full-extent block
    else:
        tp_eff = _round_down_128(min(tp_target, tp_budget, HW))
        # Guarantee >= 2 total grid steps so both v7x TensorCores get work.
        # (Harmless on 1-TC v5e/v6e: at most one extra ~0.35 us step.)
        if N * pl.cdiv(HW, tp_eff) < 2:
            tp_eff = _round_down_128(pl.cdiv(HW, 2))

    grid = (N, pl.cdiv(HW, tp_eff))

    # VMEM actually needed: double-buffered x/out tiles + single-buffered W,b.
    # The limit can never undershoot the requirement (robust for big Cin/Cout).
    need = 2 * tp_eff * (Cin * in_itemsize + Cout * out_itemsize) + w_bytes
    vmem_limit = int(max(16 * 1024 * 1024, min(need + 8 * 1024 * 1024, vmem_cap)))

    cost = pl.CostEstimate(
        flops=2 * N * HW * Cin * Cout,
        transcendentals=0,
        bytes_accessed=(N * Cin * HW * in_itemsize
                        + N * Cout * HW * out_itemsize
                        + Cout * Cin * in_itemsize + Cout * 4),
    )

    precision = (jax.lax.Precision.HIGHEST
                 if x_3d.dtype == jnp.float32 else None)
    kernel = functools.partial(_conv1x1_kernel, precision=precision)

    out_3d = pl.pallas_call(
        kernel,
        out_shape=jax.ShapeDtypeStruct((N, Cout, HW), out_dtype),
        grid_spec=pltpu.PrefetchScalarGridSpec(
            num_scalar_prefetch=0,
            grid=grid,
            in_specs=[
                # (1, Cin, TP) block, leading dim squeezed -> kernel sees (Cin, TP)
                pl.BlockSpec((None, Cin, tp_eff), lambda n, p: (n, 0, p)),
                # Constant index_map -> DMA'd once; single-buffer to save VMEM.
                pl.BlockSpec((Cout, Cin), lambda n, p: (0, 0),
                             pipeline_mode=pl.Buffered(1)),
                pl.BlockSpec((Cout, 1), lambda n, p: (0, 0),
                             pipeline_mode=pl.Buffered(1)),
            ],
            out_specs=pl.BlockSpec((None, Cout, tp_eff), lambda n, p: (n, 0, p)),
        ),
        compiler_params=pltpu.CompilerParams(
            dimension_semantics=("parallel", "parallel"),
            vmem_limit_bytes=vmem_limit,
        ),
        cost_estimate=cost,
    )(x_3d, w_mat, b_col)

    # Glue: (N, Cout, HW) -> NCHW (free reshape)
    return out_3d.reshape(N, Cout, H, W)


if __name__ == "__main__":
    key = jax.random.PRNGKey(0)
    kx, kw, kb = jax.random.split(key, 3)

    # Small shapes consistent with the module: inchannels -> inchannels 1x1 conv
    batch, inchannels, spatial = 2, 32, 16
    x = jax.random.normal(kx, (batch, inchannels, spatial, spatial), jnp.float32)
    weight = jax.random.normal(kw, (inchannels, inchannels, 1, 1), jnp.float32) * 0.05
    bias = jax.random.normal(kb, (inchannels,), jnp.float32) * 0.05

    out = conv1x1_pallas(x, weight, bias)
    out = jax.block_until_ready(out)

    # Reference check (plain JAX einsum == 1x1 conv)
    ref = jnp.einsum(
        "nchw,oc->nohw", x, weight.reshape(inchannels, inchannels),
        precision=jax.lax.Precision.HIGHEST,
    ) + bias.reshape(1, -1, 1, 1)
    assert out.shape == (batch, inchannels, spatial, spatial)
    assert jnp.max(jnp.abs(out - ref)) < 1e-4

    print("KERNEL_OK")
</pallas_src>

<mosaic_0001>
module attributes {stable_mosaic.version = 11 : i64} {
  func.func @_conv1x1_kernel(%arg0: i32, %arg1: i32, %arg2: memref<1x32x256xf32, #tpu.memory_space<vmem>>, %arg3: memref<32x32xf32, #tpu.memory_space<vmem>>, %arg4: memref<32x1xf32, #tpu.memory_space<vmem>>, %arg5: memref<1x32x256xf32, #tpu.memory_space<vmem>>) attributes {dimension_semantics = [#tpu.dimension_semantics<parallel>, #tpu.dimension_semantics<parallel>], iteration_bounds = array<i64: 2, 1>, scalar_prefetch = 0 : i64, scratch_operands = 0 : i64, tpu.core_type = #tpu.core_type<tc>, window_params = [{transform_indices = @transform_0, window_bounds = array<i64: 1, 32, 256>}, {pipeline_mode = #tpu.pipeline_mode<synchronous>, transform_indices = @transform_1, window_bounds = array<i64: 32, 32>}, {pipeline_mode = #tpu.pipeline_mode<synchronous>, transform_indices = @transform_2, window_bounds = array<i64: 32, 1>}, {transform_indices = @transform_3, window_bounds = array<i64: 1, 32, 256>}]} {
    %c0 = arith.constant 0 : index
    %c0_0 = arith.constant 0 : index
    %0 = vector.load %arg3[%c0, %c0_0] : memref<32x32xf32, #tpu.memory_space<vmem>>, vector<32x32xf32>
    %c0_1 = arith.constant 0 : index
    %c0_2 = arith.constant 0 : index
    %c0_3 = arith.constant 0 : index
    %1 = vector.load %arg2[%c0_1, %c0_2, %c0_3] : memref<1x32x256xf32, #tpu.memory_space<vmem>>, vector<1x32x256xf32>
    %2 = vector.shape_cast %1 : vector<1x32x256xf32> to vector<32x256xf32>
    %cst = arith.constant dense<0.000000e+00> : vector<32x256xf32>
    %3 = tpu.matmul %0, %2, %cst {dimension_numbers = #tpu.dot_dimension_numbers<[1], [0], [0], [1], [0, 0, 1, 1], [], []>, precision = #tpu.contract_precision<fp32>} : vector<32x32xf32>, vector<32x256xf32>, vector<32x256xf32> -> vector<32x256xf32>
    %c0_4 = arith.constant 0 : index
    %c0_5 = arith.constant 0 : index
    %4 = vector.load %arg4[%c0_4, %c0_5] : memref<32x1xf32, #tpu.memory_space<vmem>>, vector<32x1xf32>
    %5 = vector.broadcast %4 : vector<32x1xf32> to vector<32x256xf32>
    %6 = arith.addf %3, %5 : vector<32x256xf32>
    %c0_6 = arith.constant 0 : index
    %c0_7 = arith.constant 0 : index
    %c0_8 = arith.constant 0 : index
    %7 = vector.load %arg5[%c0_6, %c0_7, %c0_8] : memref<1x32x256xf32, #tpu.memory_space<vmem>>, vector<1x32x256xf32>
    %8 = vector.shape_cast %7 : vector<1x32x256xf32> to vector<32x256xf32>
    %9 = vector.shape_cast %6 : vector<32x256xf32> to vector<1x32x256xf32>
    tpu.vector_store %arg5[%c0_6, %c0_7, %c0_8], %9 {strides = array<i32>} : memref<1x32x256xf32, #tpu.memory_space<vmem>>, vector<1x32x256xf32>,
    return
  }
  func.func @transform_0(%arg0: i32, %arg1: i32) -> (i32, i32, i32) {
    %c0_i32 = arith.constant 0 : i32
    %c0_i32_0 = arith.constant 0 : i32
    return %arg0, %c0_i32, %arg1 : i32, i32, i32
  }
  func.func @transform_1(%arg0: i32, %arg1: i32) -> (i32, i32) {
    %c0_i32 = arith.constant 0 : i32
    %c0_i32_0 = arith.constant 0 : i32
    %c0_i32_1 = arith.constant 0 : i32
    return %c0_i32, %c0_i32_0 : i32, i32
  }
  func.func @transform_2(%arg0: i32, %arg1: i32) -> (i32, i32) {
    %c0_i32 = arith.constant 0 : i32
    %c0_i32_0 = arith.constant 0 : i32
    %c0_i32_1 = arith.constant 0 : i32
    return %c0_i32, %c0_i32_0 : i32, i32
  }
  func.func @transform_3(%arg0: i32, %arg1: i32) -> (i32, i32, i32) {
    %c0_i32 = arith.constant 0 : i32
    %c0_i32_0 = arith.constant 0 : i32
    return %arg0, %c0_i32, %arg1 : i32, i32, i32
  }
}

</mosaic_0001>

<llo_original>
// kernel: tpu_custom_call.1
$region0: #{tpu_custom_call.1}
  #allocation0 [shape = 'u32[]', space=smem, size = 0x4, offset = 0x4, fixed_abs, tag = 'smem constant byte address 0x4 - core index']
  #allocation1 [shape = 'u32[144,128]{1,0:T(1,128)}', space=vmem, size = 0x12000, scoped, tag = 'internal scratch']
  %s0 = inlined_call_operand.hbm [shape: f32[2,32,256], index: 0, kind: input, shape index: {}]
  %s1 = inlined_call_operand.vmem [shape: f32[32,32], index: 1, kind: input, shape index: {}]
  %s2 = inlined_call_operand.vmem [shape: f32[32,1], index: 2, kind: input, shape index: {}]
  %s3 = inlined_call_operand.hbm [shape: f32[2,32,256], index: 3, kind: output, shape index: {}]
  %s4 = sld [smem:[#allocation0]]
  $region49: #{tpu_custom_call.1} parent=0
    _
  %s6 = ssub.s32 1, %s4
  %s7 = scalar_select 0, %s6, %s4
  $region1: #{tpu_custom_call.1} parent=0
    #allocation2 [shape = 'u8[65536]{0}', space=vmem, size = 0x10000, scoped, tag = 'input window, operand 0']
    #allocation3 [shape = 's32[2]{0}', space=sflag, size = 0x8, scoped, tag = 'scoped memory for tpu_custom_call.1']
    #allocation4 [shape = 's32[2]{0}', space=sflag, size = 0x8, scoped, tag = 'scoped memory for tpu_custom_call.1']
    #allocation5 [shape = 'u8[65536]{0}', space=vmem, size = 0x10000, scoped, tag = 'output window, operand 0']
    %8 = vsyncpa [#allocation3], 0
    %s9 = scalar_lea.sflag [#allocation3], 1
    %10 = vsyncpa %s9, 0
    %11 = vsyncpa [#allocation4], 0
    %s12 = scalar_lea.sflag [#allocation4], 1
    %13 = vsyncpa %s12, 0
    loop: start=0, step=1, limit=4
    $region2: #{tpu_custom_call.1} parent=1 // loop_pre_header
      _
    $region3: #{tpu_custom_call.1} parent=1 // loop_header
      %s15 = sphi 0, %s19
      %p16 = scmp.ge.s32.totalorder %s15, 4
      %s22 = sphi 0, %s34
      %s23 = sphi 0, %s30
      %s24 = sphi 0, %s22
      %s25 = sphi 0, %s23
      %s26 = sphi 0, %s24
      %s27 = sphi 0, %s25
      %s39 = sphi 0, %s41
      %s42 = sphi 0, %s39
      %s43 = sphi 0, %s42
      %s59 = sphi 0, %s43
      %s63 = sphi 0, %s63
      %s65 = sphi 0, %s63
      %s66 = sphi 0, %s65
      %s80 = sphi 0, %s66
      %s84 = sphi 0, %s84
      %s86 = sphi 0, %s84
      %s87 = sphi 0, %s86
      %s101 = sphi 0, %s87
      %s109 = sphi 0, %s111
      %s112 = sphi 0, %s109
      %s113 = sphi 0, %s112
      %s129 = sphi 0, %s113
    $region4: #{tpu_custom_call.1} parent=1 // loop_header_branch
      %18 = sbr.rel (%p16) target = $region8
    $region5: #{tpu_custom_call.1} parent=1 // loop_body
      %s20 = ssub.s32 %s15, 1
      %s21 = ssub.s32 %s15, 2
      %s28 = sadd.s32 1, %s23
      %p29 = scmp.ge.s32.totalorder %s28, 1
      %s30 = scalar_select %p29, 0, %s28
      %s31 = sadd.s32 1, %s22
      %s32 = scalar_select %p29, %s31, %s22
      %p33 = scmp.ge.s32.totalorder %s32, 2
      %s34 = scalar_select %p33, 0, %s32
      %s35 = ssub.s32 %s22, %s34
      %s36 = ssub.s32 %s23, %s30
      %s37 = sor.u32 %s35, %s36
      %p38 = scmp.eq.s32.totalorder %s37, 0
      %s40 = sadd.s32 %s39, 1
      %s41 = scalar_select %p38, %s39, %s40
      %p44 = pneg %p38
      %p45 = scmp.eq.s32.totalorder %s15, 1
      %p46 = por %p44, %p45
      %p47 = scmp.ne.s32.totalorder %s39, %s42
      %p48 = scmp.eq.s32.totalorder %s15, 0
      %p49 = por %p47, %p48
      %p50 = scmp.ne.s32.totalorder %s39, %s42
      %p51 = scmp.eq.s32.totalorder %s20, 1
      %p52 = por %p50, %p51
      %p53 = scmp.ne.s32.totalorder %s42, %s43
      %p54 = scmp.eq.s32.totalorder %s20, 0
      %p55 = por %p53, %p54
      %p56 = scmp.ne.s32.totalorder %s42, %s43
      %p57 = scmp.eq.s32.totalorder %s21, 1
      %p58 = por %p56, %p57
      %p60 = scmp.ne.s32.totalorder %s43, %s59
      %p61 = scmp.eq.s32.totalorder %s21, 0
      %p62 = por %p60, %p61
      %s64 = sadd.s32 %s63, 1
      %p67 = scmp.eq.s32.totalorder %s15, 1
      %p68 = scmp.ne.s32.totalorder %s63, %s65
      %p69 = scmp.eq.s32.totalorder %s15, 0
      %p70 = por %p68, %p69
      %p71 = scmp.ne.s32.totalorder %s63, %s65
      %p72 = scmp.eq.s32.totalorder %s20, 1
      %p73 = por %p71, %p72
      %p74 = scmp.ne.s32.totalorder %s65, %s66
      %p75 = scmp.eq.s32.totalorder %s20, 0
      %p76 = por %p74, %p75
      %p77 = scmp.ne.s32.totalorder %s65, %s66
      %p78 = scmp.eq.s32.totalorder %s21, 1
      %p79 = por %p77, %p78
      %p81 = scmp.ne.s32.totalorder %s66, %s80
      %p82 = scmp.eq.s32.totalorder %s21, 0
      %p83 = por %p81, %p82
      %s85 = sadd.s32 %s84, 1
      %p88 = scmp.eq.s32.totalorder %s15, 1
      %p89 = scmp.ne.s32.totalorder %s84, %s86
      %p90 = scmp.eq.s32.totalorder %s15, 0
      %p91 = por %p89, %p90
      %p92 = scmp.ne.s32.totalorder %s84, %s86
      %p93 = scmp.eq.s32.totalorder %s20, 1
      %p94 = por %p92, %p93
      %p95 = scmp.ne.s32.totalorder %s86, %s87
      %p96 = scmp.eq.s32.totalorder %s20, 0
      %p97 = por %p95, %p96
      %p98 = scmp.ne.s32.totalorder %s86, %s87
      %p99 = scmp.eq.s32.totalorder %s21, 1
      %p100 = por %p98, %p99
      %p102 = scmp.ne.s32.totalorder %s87, %s101
      %p103 = scmp.eq.s32.totalorder %s21, 0
      %p104 = por %p102, %p103
      %s105 = ssub.s32 %s22, %s34
      %s106 = ssub.s32 %s23, %s30
      %s107 = sor.u32 %s105, %s106
      %p108 = scmp.eq.s32.totalorder %s107, 0
      %s110 = sadd.s32 %s109, 1
      %s111 = scalar_select %p108, %s109, %s110
      %p114 = pneg %p108
      %p115 = scmp.eq.s32.totalorder %s15, 1
      %p116 = por %p114, %p115
      %p117 = scmp.ne.s32.totalorder %s109, %s112
      %p118 = scmp.eq.s32.totalorder %s15, 0
      %p119 = por %p117, %p118
      %p120 = scmp.ne.s32.totalorder %s109, %s112
      %p121 = scmp.eq.s32.totalorder %s20, 1
      %p122 = por %p120, %p121
      %p123 = scmp.ne.s32.totalorder %s112, %s113
      %p124 = scmp.eq.s32.totalorder %s20, 0
      %p125 = por %p123, %p124
      %p126 = scmp.ne.s32.totalorder %s112, %s113
      %p127 = scmp.eq.s32.totalorder %s21, 1
      %p128 = por %p126, %p127
      %p130 = scmp.ne.s32.totalorder %s113, %s129
      %p131 = scmp.eq.s32.totalorder %s21, 0
      %p132 = por %p130, %p131
      %p133 = scmp.le.s32.totalorder 1, %s15
      %p134 = scmp.lt.s32.totalorder %s15, 3
      %p135 = pnand %p133, %p134
      %p136 = pneg %p135
      // Predicated region
      $region9: #{tpu_custom_call.1} parent=5 // pred_check
        _
      $region10: #{tpu_custom_call.1} parent=5 // pred_check_branch
        %138 = sbr.rel (%p135) target = $region12
      $region11: #{tpu_custom_call.1} parent=5 // pred_region
        %s139 = ssub.s32 %s15, 1
        // Predicated region
        $region13: #{tpu_custom_call.1} parent=11 // pred_check
          %p140 = pneg %p76
        $region14: #{tpu_custom_call.1} parent=11 // pred_check_branch
          %142 = sbr.rel (%p140) target = $region16
        $region15: #{tpu_custom_call.1} parent=11 // pred_region
          _
        $region16: #{tpu_custom_call.1} parent=11 // pred_fallthru
          _
        // Predicated region
        $region17: #{tpu_custom_call.1} parent=11 // pred_check
          %p143 = pneg %p97
        $region18: #{tpu_custom_call.1} parent=11 // pred_check_branch
          %145 = sbr.rel (%p143) target = $region20
        $region19: #{tpu_custom_call.1} parent=11 // pred_region
          _
        $region20: #{tpu_custom_call.1} parent=11 // pred_fallthru
          _
      $region12: #{tpu_custom_call.1} parent=5 // pred_fallthru
        _
      %p146 = scmp.lt.s32.totalorder %s15, 2
      // Predicated region
      $region21: #{tpu_custom_call.1} parent=5 // pred_check
        %p147 = pneg %p146
      $region22: #{tpu_custom_call.1} parent=5 // pred_check_branch
        %149 = sbr.rel (%p147) target = $region24
      $region23: #{tpu_custom_call.1} parent=5 // pred_region
        // Predicated region
        $region25: #{tpu_custom_call.1} parent=23 // pred_check
          %p150 = pneg %p49
        $region26: #{tpu_custom_call.1} parent=23 // pred_check_branch
          %152 = sbr.rel (%p150) target = $region28
        $region27: #{tpu_custom_call.1} parent=23 // pred_region
          %s153 = sand.u32 %s39, 1
          %s154 = scalar_lea.sflag [#allocation3], %s153
          %s155 = sand.u32 %s39, 1
          %s156 = smul.addr %s155, 64
          %s157 = scalar_lea.vmem [#allocation2], %s156
          %s158 = smul.u32 2, %s23
          %s160 = ssub.s32 1024, 1024
          %161 = vsyncadd %s154, %s160
          %s162 = smul.addr %s22, 8
          %s163 = sadd.s32 %s158, %s162
          %s164 = smul.addr %s163, 128
          %s165 = scalar_lea.hbm %s0, %s164
          %s166 = sshll.u32 %s157, 4
          %s167 = int_to_ptr.vmem [resolvable:$true] %s166
          %172 = dma.hbm_to_vmem [thread:$0]  %s165, 1024, %s167, %s154, 256, 256, 16
        $region28: #{tpu_custom_call.1} parent=23 // pred_fallthru
          _
      $region24: #{tpu_custom_call.1} parent=5 // pred_fallthru
        _
      %p173 = scmp.le.s32.totalorder 1, %s15
      %p174 = scmp.lt.s32.totalorder %s15, 3
      %p175 = pnand %p173, %p174
      %p176 = pneg %p175
      // Predicated region
      $region29: #{tpu_custom_call.1} parent=5 // pred_check
        _
      $region30: #{tpu_custom_call.1} parent=5 // pred_check_branch
        %178 = sbr.rel (%p175) target = $region32
      $region31: #{tpu_custom_call.1} parent=5 // pred_region
        %s179 = ssub.s32 %s15, 1
        %s180 = sand.u32 %s42, 1
        %s181 = scalar_lea.sflag [#allocation3], %s180
        %s182 = sand.u32 %s42, 1
        %s183 = smul.addr %s182, 64
        %s184 = scalar_lea.vmem [#allocation2], %s183
        // Predicated region
        $region33: #{tpu_custom_call.1} parent=31 // pred_check
          %p185 = pneg %p55
        $region34: #{tpu_custom_call.1} parent=31 // pred_check_branch
          %187 = sbr.rel (%p185) target = $region36
        $region35: #{tpu_custom_call.1} parent=31 // pred_region
          %188 = dma.done %s181, 1024
        $region36: #{tpu_custom_call.1} parent=31 // pred_fallthru
          _
        %s189 = sand.u32 %s42, 1
        %s190 = scalar_lea.sflag [#allocation3], %s189
        %s191 = sand.u32 %s42, 1
        %s192 = smul.addr %s191, 64
        %s193 = scalar_lea.vmem [#allocation2], %s192
        %p194 = pneg %p55
        %p195 = pneg %p52
        %p196 = pneg %p76
        %p197 = pneg %p73
        %p198 = pneg %p97
        %p199 = pneg %p94
        %p200 = pneg %p125
        %p201 = pneg %p122
        %s202 = sand.u32 %s112, 1
        %s203 = scalar_lea.sflag [#allocation4], %s202
        %s204 = sand.u32 %s112, 1
        %s205 = smul.addr %s204, 64
        %s206 = scalar_lea.vmem [#allocation5], %s205
        %s207 = smul.u32 2, %s25
        %s208 = smul.u32 2, %s25
        %v209 = vld [vmem:[%s1] sm:$0xff]
        %v210 = vld [vmem:[%s1 + $0x8] sm:$0xff]
        %v211 = vld [vmem:[%s1 + $0x10] sm:$0xff]
        %v212 = vld [vmem:[%s1 + $0x18] sm:$0xff]
        %v213 = vld [vmem:[%s184] sm:$0xff]
        %v214 = vld [vmem:[%s184 + $0x8] sm:$0xff]
        %v215 = vld [vmem:[%s184 + $0x10] sm:$0xff]
        %v216 = vld [vmem:[%s184 + $0x18] sm:$0xff]
        %v217 = vld [vmem:[%s184 + $0x20] sm:$0xff]
        %v218 = vld [vmem:[%s184 + $0x28] sm:$0xff]
        %v219 = vld [vmem:[%s184 + $0x30] sm:$0xff]
        %v220 = vld [vmem:[%s184 + $0x38] sm:$0xff]
        %v221 = vld [vmem:[%s2] sm:$0xff]
        %v222 = vld [vmem:[%s2 + $0x8] sm:$0xff]
        %v223 = vld [vmem:[%s2 + $0x10] sm:$0xff]
        %v224 = vld [vmem:[%s2 + $0x18] sm:$0xff]
        %226 = vset.pattern.permute.xlu0 0
        %227 = vperm.xlu0 %226, %v221
        %v228 = vpop.permute.xlu0 %227
        %231 = vset.pattern.permute.xlu0 0
        %232 = vperm.xlu0 %231, %v222
        %v233 = vpop.permute.xlu0 %232
        %236 = vset.pattern.permute.xlu0 0
        %237 = vperm.xlu0 %236, %v223
        %v238 = vpop.permute.xlu0 %237
        %241 = vset.pattern.permute.xlu0 0
        %242 = vperm.xlu0 %241, %v224
        %v243 = vpop.permute.xlu0 %242
        %vm245 = vcmask 261120
        %v247 = vsel %vm245, %v209, 0
        %v250 = vsel %vm245, %v210, 0
        %v253 = vsel %vm245, %v211, 0
        %v256 = vsel %vm245, %v212, 0
        %v258 = vand.u32 %v214, 4294901760
        %259 = vmatprep.subr.mxu0 %v258
        %v260 = vand.u32 %v213, 4294901760
        %261 = vmatpush1.msra.mxu0 %v260
        %v262 = vand.u32 %v216, 4294901760
        %263 = vmatprep.subr.mxu0 %v262
        %v264 = vand.u32 %v215, 4294901760
        %265 = vmatpush1.msra.mxu0 %v264
        %v266 = vand.u32 %v218, 4294901760
        %267 = vmatprep.subr.mxu0 %v266
        %v268 = vand.u32 %v217, 4294901760
        %269 = vmatpush1.msra.mxu0 %v268
        %v270 = vand.u32 %v220, 4294901760
        %271 = vmatprep.subr.mxu0 %v270
        %v272 = vand.u32 %v219, 4294901760
        %273 = vmatpush1.msra.mxu0 %v272
        %274 = vmatprep.subr.mxu0 0.0
        %275 = vmatpush1.msra.mxu0 0.0
        %276 = vmatprep.subr.mxu0 0.0
        %277 = vmatpush1.msra.mxu0 0.0
        %278 = vmatprep.subr.mxu0 0.0
        %279 = vmatpush1.msra.mxu0 0.0
        %280 = vmatprep.subr.mxu0 0.0
        %281 = vmatpush1.msra.mxu0 0.0
        %282 = vmatprep.subr.mxu0 0.0
        %283 = vmatpush1.msra.mxu0 0.0
        %284 = vmatprep.subr.mxu0 0.0
        %285 = vmatpush1.msra.mxu0 0.0
        %286 = vmatprep.subr.mxu0 0.0
        %287 = vmatpush1.msra.mxu0 0.0
        %288 = vmatprep.subr.mxu0 0.0
        %289 = vmatpush1.msra.mxu0 0.0
        %290 = vmatprep.subr.mxu0 0.0
        %291 = vmatpush1.msra.mxu0 0.0
        %292 = vmatprep.subr.mxu0 0.0
        %293 = vmatpush1.msra.mxu0 0.0
        %294 = vmatprep.subr.mxu0 0.0
        %295 = vmatpush1.msra.mxu0 0.0
        %296 = vmatprep.subr.mxu0 0.0
        %297 = vmatpush1.msra.mxu0 0.0
        %298 = vmatprep.subr.mxu0 0.0
        %299 = vmatpush1.msra.mxu0 0.0
        %300 = vmatprep.subr.mxu0 0.0
        %301 = vmatpush1.msra.mxu0 0.0
        %302 = vmatprep.subr.mxu0 0.0
        %303 = vmatpush1.msra.mxu0 0.0
        %304 = vmatprep.subr.mxu0 0.0
        %305 = vmatpush1.msra.mxu0 0.0
        %306 = vmatprep.subr.mxu0 0.0
        %307 = vmatpush1.msra.mxu0 0.0
        %308 = vmatprep.subr.mxu0 0.0
        %309 = vmatpush1.msra.mxu0 0.0
        %310 = vmatprep.subr.mxu0 0.0
        %311 = vmatpush1.msra.mxu0 0.0
        %312 = vmatprep.subr.mxu0 0.0
        %313 = vmatpush1.msra.mxu0 0.0
        %314 = vmatprep.subr.mxu0 0.0
        %315 = vmatpush1.msra.mxu0 0.0
        %316 = vmatprep.subr.mxu0 0.0
        %317 = vmatpush1.msra.mxu0 0.0
        %318 = vmatprep.subr.mxu0 0.0
        %319 = vmatpush1.msra.mxu0 0.0
        %320 = vmatprep.subr.mxu0 0.0
        %321 = vmatpush1.msra.mxu0 0.0
        %322 = vmatprep.subr.mxu0 0.0
        %323 = vmatpush1.msra.mxu0 0.0
        %324 = vmatprep.subr.mxu0 0.0
        %325 = vmatpush1.msra.mxu0 0.0
        %326 = vmatprep.subr.mxu0 0.0
        %327 = vmatpush1.msra.mxu0 0.0
        %328 = vmatprep.subr.mxu0 0.0
        %329 = vmatpush1.msra.mxu0 0.0
        %330 = vmatprep.mubr.f32.mxu0 0.0
        %v331 = vand.u32 %v247, 4294901760
        %v332 = vsub.f32 %v247, %v331
        %v333 = vand.u32 %v332, 4294901760
        %v334 = vsub.f32 %v332, %v333
        %v335 = vand.u32 %v334, 4294901760
        %336 = vmatmul.mubr.f32.gmra.mrb[0].mxu0 %v335
        %v337 = vpop.f32.mrb[0].mxu0
        %v338 = vadd.f32 %v228, %v337
        %v339 = vpop.f32.mrb[0].mxu0
        %v340 = vadd.f32 %v228, %v339
        %341 = vmatprep.mubr.f32.mxu0 0.0
        %v342 = vand.u32 %v250, 4294901760
        %v343 = vsub.f32 %v250, %v342
        %v344 = vand.u32 %v343, 4294901760
        %v345 = vsub.f32 %v343, %v344
        %v346 = vand.u32 %v345, 4294901760
        %347 = vmatmul.mubr.f32.gmra.mrb[0].mxu0 %v346
        %v348 = vpop.f32.mrb[0].mxu0
        %v349 = vadd.f32 %v233, %v348
        %v350 = vpop.f32.mrb[0].mxu0
        %v351 = vadd.f32 %v233, %v350
        %352 = vmatprep.mubr.f32.mxu0 0.0
        %v353 = vand.u32 %v253, 4294901760
        %v354 = vsub.f32 %v253, %v353
        %v355 = vand.u32 %v354, 4294901760
        %v356 = vsub.f32 %v354, %v355
        %v357 = vand.u32 %v356, 4294901760
        %358 = vmatmul.mubr.f32.gmra.mrb[0].mxu0 %v357
        %v359 = vpop.f32.mrb[0].mxu0
        %v360 = vadd.f32 %v238, %v359
        %v361 = vpop.f32.mrb[0].mxu0
        %v362 = vadd.f32 %v238, %v361
        %363 = vmatprep.mubr.f32.mxu0 0.0
        %v364 = vand.u32 %v256, 4294901760
        %v365 = vsub.f32 %v256, %v364
        %v366 = vand.u32 %v365, 4294901760
        %v367 = vsub.f32 %v365, %v366
        %v368 = vand.u32 %v367, 4294901760
        %369 = vmatmul.mubr.f32.gmra.mrb[0].mxu0 %v368
        %v370 = vpop.f32.mrb[0].mxu0
        %v371 = vadd.f32 %v243, %v370
        %v372 = vpop.f32.mrb[0].mxu0
        %v373 = vadd.f32 %v243, %v372
        %374 = vdwg.mxu0
        %v375 = vand.u32 %v214, 4294901760
        %v376 = vsub.f32 %v214, %v375
        %v377 = vand.u32 %v376, 4294901760
        %v378 = vsub.f32 %v376, %v377
        %v379 = vand.u32 %v378, 4294901760
        %380 = vmatprep.subr.mxu0 %v379
        %v381 = vand.u32 %v213, 4294901760
        %v382 = vsub.f32 %v213, %v381
        %v383 = vand.u32 %v382, 4294901760
        %v384 = vsub.f32 %v382, %v383
        %v385 = vand.u32 %v384, 4294901760
        %386 = vmatpush1.msra.mxu0 %v385
        %v387 = vand.u32 %v216, 4294901760
        %v388 = vsub.f32 %v216, %v387
        %v389 = vand.u32 %v388, 4294901760
        %v390 = vsub.f32 %v388, %v389
        %v391 = vand.u32 %v390, 4294901760
        %392 = vmatprep.subr.mxu0 %v391
        %v393 = vand.u32 %v215, 4294901760
        %v394 = vsub.f32 %v215, %v393
        %v395 = vand.u32 %v394, 4294901760
        %v396 = vsub.f32 %v394, %v395
        %v397 = vand.u32 %v396, 4294901760
        %398 = vmatpush1.msra.mxu0 %v397
        %v399 = vand.u32 %v218, 4294901760
        %v400 = vsub.f32 %v218, %v399
        %v401 = vand.u32 %v400, 4294901760
        %v402 = vsub.f32 %v400, %v401
        %v403 = vand.u32 %v402, 4294901760
        %404 = vmatprep.subr.mxu0 %v403
        %v405 = vand.u32 %v217, 4294901760
        %v406 = vsub.f32 %v217, %v405
        %v407 = vand.u32 %v406, 4294901760
        %v408 = vsub.f32 %v406, %v407
        %v409 = vand.u32 %v408, 4294901760
        %410 = vmatpush1.msra.mxu0 %v409
        %v411 = vand.u32 %v220, 4294901760
        %v412 = vsub.f32 %v220, %v411
        %v413 = vand.u32 %v412, 4294901760
        %v414 = vsub.f32 %v412, %v413
        %v415 = vand.u32 %v414, 4294901760
        %416 = vmatprep.subr.mxu0 %v415
        %v417 = vand.u32 %v219, 4294901760
        %v418 = vsub.f32 %v219, %v417
        %v419 = vand.u32 %v418, 4294901760
        %v420 = vsub.f32 %v418, %v419
        %v421 = vand.u32 %v420, 4294901760
        %422 = vmatpush1.msra.mxu0 %v421
        %423 = vmatprep.subr.mxu0 0.0
        %424 = vmatpush1.msra.mxu0 0.0
        %425 = vmatprep.subr.mxu0 0.0
        %426 = vmatpush1.msra.mxu0 0.0
        %427 = vmatprep.subr.mxu0 0.0
        %428 = vmatpush1.msra.mxu0 0.0
        %429 = vmatprep.subr.mxu0 0.0
        %430 = vmatpush1.msra.mxu0 0.0
        %431 = vmatprep.subr.mxu0 0.0
        %432 = vmatpush1.msra.mxu0 0.0
        %433 = vmatprep.subr.mxu0 0.0
        %434 = vmatpush1.msra.mxu0 0.0
        %435 = vmatprep.subr.mxu0 0.0
        %436 = vmatpush1.msra.mxu0 0.0
        %437 = vmatprep.subr.mxu0 0.0
        %438 = vmatpush1.msra.mxu0 0.0
        %439 = vmatprep.subr.mxu0 0.0
        %440 = vmatpush1.msra.mxu0 0.0
        %441 = vmatprep.subr.mxu0 0.0
        %442 = vmatpush1.msra.mxu0 0.0
        %443 = vmatprep.subr.mxu0 0.0
        %444 = vmatpush1.msra.mxu0 0.0
        %445 = vmatprep.subr.mxu0 0.0
        %446 = vmatpush1.msra.mxu0 0.0
        %447 = vmatprep.subr.mxu0 0.0
        %448 = vmatpush1.msra.mxu0 0.0
        %449 = vmatprep.subr.mxu0 0.0
        %450 = vmatpush1.msra.mxu0 0.0
        %451 = vmatprep.subr.mxu0 0.0
        %452 = vmatpush1.msra.mxu0 0.0
        %453 = vmatprep.subr.mxu0 0.0
        %454 = vmatpush1.msra.mxu0 0.0
        %455 = vmatprep.subr.mxu0 0.0
        %456 = vmatpush1.msra.mxu0 0.0
        %457 = vmatprep.subr.mxu0 0.0
        %458 = vmatpush1.msra.mxu0 0.0
        %459 = vmatprep.subr.mxu0 0.0
        %460 = vmatpush1.msra.mxu0 0.0
        %461 = vmatprep.subr.mxu0 0.0
        %462 = vmatpush1.msra.mxu0 0.0
        %463 = vmatprep.subr.mxu0 0.0
        %464 = vmatpush1.msra.mxu0 0.0
        %465 = vmatprep.subr.mxu0 0.0
        %466 = vmatpush1.msra.mxu0 0.0
        %467 = vmatprep.subr.mxu0 0.0
        %468 = vmatpush1.msra.mxu0 0.0
        %469 = vmatprep.subr.mxu0 0.0
        %470 = vmatpush1.msra.mxu0 0.0
        %471 = vmatprep.subr.mxu0 0.0
        %472 = vmatpush1.msra.mxu0 0.0
        %473 = vmatprep.subr.mxu0 0.0
        %474 = vmatpush1.msra.mxu0 0.0
        %475 = vmatprep.subr.mxu0 0.0
        %476 = vmatpush1.msra.mxu0 0.0
        %477 = vmatprep.subr.mxu0 0.0
        %478 = vmatpush1.msra.mxu0 0.0
        %479 = vmatprep.mubr.f32.mxu0 0.0
        %v480 = vand.u32 %v247, 4294901760
        %481 = vmatmul.mubr.f32.gmra.mrb[0].mxu0 %v480
        %v482 = vpop.f32.mrb[0].mxu0
        %v483 = vadd.f32 %v338, %v482
        %v484 = vpop.f32.mrb[0].mxu0
        %v485 = vadd.f32 %v340, %v484
        %486 = vmatprep.mubr.f32.mxu0 0.0
        %v487 = vand.u32 %v250, 4294901760
        %488 = vmatmul.mubr.f32.gmra.mrb[0].mxu0 %v487
        %v489 = vpop.f32.mrb[0].mxu0
        %v490 = vadd.f32 %v349, %v489
        %v491 = vpop.f32.mrb[0].mxu0
        %v492 = vadd.f32 %v351, %v491
        %493 = vmatprep.mubr.f32.mxu0 0.0
        %v494 = vand.u32 %v253, 4294901760
        %495 = vmatmul.mubr.f32.gmra.mrb[0].mxu0 %v494
        %v496 = vpop.f32.mrb[0].mxu0
        %v497 = vadd.f32 %v360, %v496
        %v498 = vpop.f32.mrb[0].mxu0
        %v499 = vadd.f32 %v362, %v498
        %500 = vmatprep.mubr.f32.mxu0 0.0
        %v501 = vand.u32 %v256, 4294901760
        %502 = vmatmul.mubr.f32.gmra.mrb[0].mxu0 %v501
        %v503 = vpop.f32.mrb[0].mxu0
        %v504 = vadd.f32 %v371, %v503
        %v505 = vpop.f32.mrb[0].mxu0
        %v506 = vadd.f32 %v373, %v505
        %507 = vdwg.mxu0
        %v508 = vand.u32 %v214, 4294901760
        %v509 = vsub.f32 %v214, %v508
        %510 = vmatprep.subr.mxu0 %v509
        %v511 = vand.u32 %v213, 4294901760
        %v512 = vsub.f32 %v213, %v511
        %513 = vmatpush1.msra.mxu0 %v512
        %v514 = vand.u32 %v216, 4294901760
        %v515 = vsub.f32 %v216, %v514
        %516 = vmatprep.subr.mxu0 %v515
        %v517 = vand.u32 %v215, 4294901760
        %v518 = vsub.f32 %v215, %v517
        %519 = vmatpush1.msra.mxu0 %v518
        %v520 = vand.u32 %v218, 4294901760
        %v521 = vsub.f32 %v218, %v520
        %522 = vmatprep.subr.mxu0 %v521
        %v523 = vand.u32 %v217, 4294901760
        %v524 = vsub.f32 %v217, %v523
        %525 = vmatpush1.msra.mxu0 %v524
        %v526 = vand.u32 %v220, 4294901760
        %v527 = vsub.f32 %v220, %v526
        %528 = vmatprep.subr.mxu0 %v527
        %v529 = vand.u32 %v219, 4294901760
        %v530 = vsub.f32 %v219, %v529
        %531 = vmatpush1.msra.mxu0 %v530
        %532 = vmatprep.subr.mxu0 0.0
        %533 = vmatpush1.msra.mxu0 0.0
        %534 = vmatprep.subr.mxu0 0.0
        %535 = vmatpush1.msra.mxu0 0.0
        %536 = vmatprep.subr.mxu0 0.0
        %537 = vmatpush1.msra.mxu0 0.0
        %538 = vmatprep.subr.mxu0 0.0
        %539 = vmatpush1.msra.mxu0 0.0
        %540 = vmatprep.subr.mxu0 0.0
        %541 = vmatpush1.msra.mxu0 0.0
        %542 = vmatprep.subr.mxu0 0.0
        %543 = vmatpush1.msra.mxu0 0.0
        %544 = vmatprep.subr.mxu0 0.0
        %545 = vmatpush1.msra.mxu0 0.0
        %546 = vmatprep.subr.mxu0 0.0
        %547 = vmatpush1.msra.mxu0 0.0
        %548 = vmatprep.subr.mxu0 0.0
        %549 = vmatpush1.msra.mxu0 0.0
        %550 = vmatprep.subr.mxu0 0.0
        %551 = vmatpush1.msra.mxu0 0.0
        %552 = vmatprep.subr.mxu0 0.0
        %553 = vmatpush1.msra.mxu0 0.0
        %554 = vmatprep.subr.mxu0 0.0
        %555 = vmatpush1.msra.mxu0 0.0
        %556 = vmatprep.subr.mxu0 0.0
        %557 = vmatpush1.msra.mxu0 0.0
        %558 = vmatprep.subr.mxu0 0.0
        %559 = vmatpush1.msra.mxu0 0.0
        %560 = vmatprep.subr.mxu0 0.0
        %561 = vmatpush1.msra.mxu0 0.0
        %562 = vmatprep.subr.mxu0 0.0
        %563 = vmatpush1.msra.mxu0 0.0
        %564 = vmatprep.subr.mxu0 0.0
        %565 = vmatpush1.msra.mxu0 0.0
        %566 = vmatprep.subr.mxu0 0.0
        %567 = vmatpush1.msra.mxu0 0.0
        %568 = vmatprep.subr.mxu0 0.0
        %569 = vmatpush1.msra.mxu0 0.0
        %570 = vmatprep.subr.mxu0 0.0
        %571 = vmatpush1.msra.mxu0 0.0
        %572 = vmatprep.subr.mxu0 0.0
        %573 = vmatpush1.msra.mxu0 0.0
        %574 = vmatprep.subr.mxu0 0.0
        %575 = vmatpush1.msra.mxu0 0.0
        %576 = vmatprep.subr.mxu0 0.0
        %577 = vmatpush1.msra.mxu0 0.0
        %578 = vmatprep.subr.mxu0 0.0
        %579 = vmatpush1.msra.mxu0 0.0
        %580 = vmatprep.subr.mxu0 0.0
        %581 = vmatpush1.msra.mxu0 0.0
        %582 = vmatprep.subr.mxu0 0.0
        %583 = vmatpush1.msra.mxu0 0.0
        %584 = vmatprep.subr.mxu0 0.0
        %585 = vmatpush1.msra.mxu0 0.0
        %586 = vmatprep.subr.mxu0 0.0
        %587 = vmatpush1.msra.mxu0 0.0
        %588 = vmatprep.mubr.f32.mxu0 0.0
        %v589 = vand.u32 %v247, 4294901760
        %v590 = vsub.f32 %v247, %v589
        %591 = vmatmul.mubr.f32.gmra.mrb[0].mxu0 %v590
        %v592 = vpop.f32.mrb[0].mxu0
        %v593 = vadd.f32 %v483, %v592
        %v594 = vpop.f32.mrb[0].mxu0
        %v595 = vadd.f32 %v485, %v594
        %596 = vmatprep.mubr.f32.mxu0 0.0
        %v597 = vand.u32 %v250, 4294901760
        %v598 = vsub.f32 %v250, %v597
        %599 = vmatmul.mubr.f32.gmra.mrb[0].mxu0 %v598
        %v600 = vpop.f32.mrb[0].mxu0
        %v601 = vadd.f32 %v490, %v600
        %v602 = vpop.f32.mrb[0].mxu0
        %v603 = vadd.f32 %v492, %v602
        %604 = vmatprep.mubr.f32.mxu0 0.0
        %v605 = vand.u32 %v253, 4294901760
        %v606 = vsub.f32 %v253, %v605
        %607 = vmatmul.mubr.f32.gmra.mrb[0].mxu0 %v606
        %v608 = vpop.f32.mrb[0].mxu0
        %v609 = vadd.f32 %v497, %v608
        %v610 = vpop.f32.mrb[0].mxu0
        %v611 = vadd.f32 %v499, %v610
        %612 = vmatprep.mubr.f32.mxu0 0.0
        %v613 = vand.u32 %v256, 4294901760
        %v614 = vsub.f32 %v256, %v613
        %615 = vmatmul.mubr.f32.gmra.mrb[0].mxu0 %v614
        %v616 = vpop.f32.mrb[0].mxu0
        %v617 = vadd.f32 %v504, %v616
        %v618 = vpop.f32.mrb[0].mxu0
        %v619 = vadd.f32 %v506, %v618
        %620 = vdwg.mxu0
        %v621 = vand.u32 %v214, 4294901760
        %622 = vmatprep.subr.mxu0 %v621
        %v623 = vand.u32 %v213, 4294901760
        %624 = vmatpush1.msra.mxu0 %v623
        %v625 = vand.u32 %v216, 4294901760
        %626 = vmatprep.subr.mxu0 %v625
        %v627 = vand.u32 %v215, 4294901760
        %628 = vmatpush1.msra.mxu0 %v627
        %v629 = vand.u32 %v218, 4294901760
        %630 = vmatprep.subr.mxu0 %v629
        %v631 = vand.u32 %v217, 4294901760
        %632 = vmatpush1.msra.mxu0 %v631
        %v633 = vand.u32 %v220, 4294901760
        %634 = vmatprep.subr.mxu0 %v633
        %v635 = vand.u32 %v219, 4294901760
        %636 = vmatpush1.msra.mxu0 %v635
        %637 = vmatprep.subr.mxu0 0.0
        %638 = vmatpush1.msra.mxu0 0.0
        %639 = vmatprep.subr.mxu0 0.0
        %640 = vmatpush1.msra.mxu0 0.0
        %641 = vmatprep.subr.mxu0 0.0
        %642 = vmatpush1.msra.mxu0 0.0
        %643 = vmatprep.subr.mxu0 0.0
        %644 = vmatpush1.msra.mxu0 0.0
        %645 = vmatprep.subr.mxu0 0.0
        %646 = vmatpush1.msra.mxu0 0.0
        %647 = vmatprep.subr.mxu0 0.0
        %648 = vmatpush1.msra.mxu0 0.0
        %649 = vmatprep.subr.mxu0 0.0
        %650 = vmatpush1.msra.mxu0 0.0
        %651 = vmatprep.subr.mxu0 0.0
        %652 = vmatpush1.msra.mxu0 0.0
        %653 = vmatprep.subr.mxu0 0.0
        %654 = vmatpush1.msra.mxu0 0.0
        %655 = vmatprep.subr.mxu0 0.0
        %656 = vmatpush1.msra.mxu0 0.0
        %657 = vmatprep.subr.mxu0 0.0
        %658 = vmatpush1.msra.mxu0 0.0
        %659 = vmatprep.subr.mxu0 0.0
        %660 = vmatpush1.msra.mxu0 0.0
        %661 = vmatprep.subr.mxu0 0.0
        %662 = vmatpush1.msra.mxu0 0.0
        %663 = vmatprep.subr.mxu0 0.0
        %664 = vmatpush1.msra.mxu0 0.0
        %665 = vmatprep.subr.mxu0 0.0
        %666 = vmatpush1.msra.mxu0 0.0
        %667 = vmatprep.subr.mxu0 0.0
        %668 = vmatpush1.msra.mxu0 0.0
        %669 = vmatprep.subr.mxu0 0.0
        %670 = vmatpush1.msra.mxu0 0.0
        %671 = vmatprep.subr.mxu0 0.0
        %672 = vmatpush1.msra.mxu0 0.0
        %673 = vmatprep.subr.mxu0 0.0
        %674 = vmatpush1.msra.mxu0 0.0
        %675 = vmatprep.subr.mxu0 0.0
        %676 = vmatpush1.msra.mxu0 0.0
        %677 = vmatprep.subr.mxu0 0.0
        %678 = vmatpush1.msra.mxu0 0.0
        %679 = vmatprep.subr.mxu0 0.0
        %680 = vmatpush1.msra.mxu0 0.0
        %681 = vmatprep.subr.mxu0 0.0
        %682 = vmatpush1.msra.mxu0 0.0
        %683 = vmatprep.subr.mxu0 0.0
        %684 = vmatpush1.msra.mxu0 0.0
        %685 = vmatprep.subr.mxu0 0.0
        %686 = vmatpush1.msra.mxu0 0.0
        %687 = vmatprep.subr.mxu0 0.0
        %688 = vmatpush1.msra.mxu0 0.0
        %689 = vmatprep.subr.mxu0 0.0
        %690 = vmatpush1.msra.mxu0 0.0
        %691 = vmatprep.subr.mxu0 0.0
        %692 = vmatpush1.msra.mxu0 0.0
        %693 = vmatprep.mubr.f32.mxu0 0.0
        %v694 = vand.u32 %v247, 4294901760
        %v695 = vsub.f32 %v247, %v694
        %v696 = vand.u32 %v695, 4294901760
        %697 = vmatmul.mubr.f32.gmra.mrb[0].mxu0 %v696
        %v698 = vpop.f32.mrb[0].mxu0
        %v699 = vadd.f32 %v593, %v698
        %v700 = vpop.f32.mrb[0].mxu0
        %v701 = vadd.f32 %v595, %v700
        %702 = vmatprep.mubr.f32.mxu0 0.0
        %v703 = vand.u32 %v250, 4294901760
        %v704 = vsub.f32 %v250, %v703
        %v705 = vand.u32 %v704, 4294901760
        %706 = vmatmul.mubr.f32.gmra.mrb[0].mxu0 %v705
        %v707 = vpop.f32.mrb[0].mxu0
        %v708 = vadd.f32 %v601, %v707
        %v709 = vpop.f32.mrb[0].mxu0
        %v710 = vadd.f32 %v603, %v709
        %711 = vmatprep.mubr.f32.mxu0 0.0
        %v712 = vand.u32 %v253, 4294901760
        %v713 = vsub.f32 %v253, %v712
        %v714 = vand.u32 %v713, 4294901760
        %715 = vmatmul.mubr.f32.gmra.mrb[0].mxu0 %v714
        %v716 = vpop.f32.mrb[0].mxu0
        %v717 = vadd.f32 %v609, %v716
        %v718 = vpop.f32.mrb[0].mxu0
        %v719 = vadd.f32 %v611, %v718
        %720 = vmatprep.mubr.f32.mxu0 0.0
        %v721 = vand.u32 %v256, 4294901760
        %v722 = vsub.f32 %v256, %v721
        %v723 = vand.u32 %v722, 4294901760
        %724 = vmatmul.mubr.f32.gmra.mrb[0].mxu0 %v723
        %v725 = vpop.f32.mrb[0].mxu0
        %v726 = vadd.f32 %v617, %v725
        %v727 = vpop.f32.mrb[0].mxu0
        %v728 = vadd.f32 %v619, %v727
        %729 = vdwg.mxu0
        %v730 = vand.u32 %v214, 4294901760
        %v731 = vsub.f32 %v214, %v730
        %v732 = vand.u32 %v731, 4294901760
        %733 = vmatprep.subr.mxu0 %v732
        %v734 = vand.u32 %v213, 4294901760
        %v735 = vsub.f32 %v213, %v734
        %v736 = vand.u32 %v735, 4294901760
        %737 = vmatpush1.msra.mxu0 %v736
        %v738 = vand.u32 %v216, 4294901760
        %v739 = vsub.f32 %v216, %v738
        %v740 = vand.u32 %v739, 4294901760
        %741 = vmatprep.subr.mxu0 %v740
        %v742 = vand.u32 %v215, 4294901760
        %v743 = vsub.f32 %v215, %v742
        %v744 = vand.u32 %v743, 4294901760
        %745 = vmatpush1.msra.mxu0 %v744
        %v746 = vand.u32 %v218, 4294901760
        %v747 = vsub.f32 %v218, %v746
        %v748 = vand.u32 %v747, 4294901760
        %749 = vmatprep.subr.mxu0 %v748
        %v750 = vand.u32 %v217, 4294901760
        %v751 = vsub.f32 %v217, %v750
        %v752 = vand.u32 %v751, 4294901760
        %753 = vmatpush1.msra.mxu0 %v752
        %v754 = vand.u32 %v220, 4294901760
        %v755 = vsub.f32 %v220, %v754
        %v756 = vand.u32 %v755, 4294901760
        %757 = vmatprep.subr.mxu0 %v756
        %v758 = vand.u32 %v219, 4294901760
        %v759 = vsub.f32 %v219, %v758
        %v760 = vand.u32 %v759, 4294901760
        %761 = vmatpush1.msra.mxu0 %v760
        %762 = vmatprep.subr.mxu0 0.0
        %763 = vmatpush1.msra.mxu0 0.0
        %764 = vmatprep.subr.mxu0 0.0
        %765 = vmatpush1.msra.mxu0 0.0
        %766 = vmatprep.subr.mxu0 0.0
        %767 = vmatpush1.msra.mxu0 0.0
        %768 = vmatprep.subr.mxu0 0.0
        %769 = vmatpush1.msra.mxu0 0.0
        %770 = vmatprep.subr.mxu0 0.0
        %771 = vmatpush1.msra.mxu0 0.0
        %772 = vmatprep.subr.mxu0 0.0
        %773 = vmatpush1.msra.mxu0 0.0
        %774 = vmatprep.subr.mxu0 0.0
        %775 = vmatpush1.msra.mxu0 0.0
        %776 = vmatprep.subr.mxu0 0.0
        %777 = vmatpush1.msra.mxu0 0.0
        %778 = vmatprep.subr.mxu0 0.0
        %779 = vmatpush1.msra.mxu0 0.0
        %780 = vmatprep.subr.mxu0 0.0
        %781 = vmatpush1.msra.mxu0 0.0
        %782 = vmatprep.subr.mxu0 0.0
        %783 = vmatpush1.msra.mxu0 0.0
        %784 = vmatprep.subr.mxu0 0.0
        %785 = vmatpush1.msra.mxu0 0.0
        %786 = vmatprep.subr.mxu0 0.0
        %787 = vmatpush1.msra.mxu0 0.0
        %788 = vmatprep.subr.mxu0 0.0
        %789 = vmatpush1.msra.mxu0 0.0
        %790 = vmatprep.subr.mxu0 0.0
        %791 = vmatpush1.msra.mxu0 0.0
        %792 = vmatprep.subr.mxu0 0.0
        %793 = vmatpush1.msra.mxu0 0.0
        %794 = vmatprep.subr.mxu0 0.0
        %795 = vmatpush1.msra.mxu0 0.0
        %796 = vmatprep.subr.mxu0 0.0
        %797 = vmatpush1.msra.mxu0 0.0
        %798 = vmatprep.subr.mxu0 0.0
        %799 = vmatpush1.msra.mxu0 0.0
        %800 = vmatprep.subr.mxu0 0.0
        %801 = vmatpush1.msra.mxu0 0.0
        %802 = vmatprep.subr.mxu0 0.0
        %803 = vmatpush1.msra.mxu0 0.0
        %804 = vmatprep.subr.mxu0 0.0
        %805 = vmatpush1.msra.mxu0 0.0
        %806 = vmatprep.subr.mxu0 0.0
        %807 = vmatpush1.msra.mxu0 0.0
        %808 = vmatprep.subr.mxu0 0.0
        %809 = vmatpush1.msra.mxu0 0.0
        %810 = vmatprep.subr.mxu0 0.0
        %811 = vmatpush1.msra.mxu0 0.0
        %812 = vmatprep.subr.mxu0 0.0
        %813 = vmatpush1.msra.mxu0 0.0
        %814 = vmatprep.subr.mxu0 0.0
        %815 = vmatpush1.msra.mxu0 0.0
        %816 = vmatprep.subr.mxu0 0.0
        %817 = vmatpush1.msra.mxu0 0.0
        %818 = vmatprep.mubr.f32.mxu0 0.0
        %v819 = vand.u32 %v247, 4294901760
        %820 = vmatmul.mubr.f32.gmra.mrb[0].mxu0 %v819
        %v821 = vpop.f32.mrb[0].mxu0
        %v822 = vadd.f32 %v699, %v821
        %v823 = vpop.f32.mrb[0].mxu0
        %v824 = vadd.f32 %v701, %v823
        %825 = vmatprep.mubr.f32.mxu0 0.0
        %v826 = vand.u32 %v250, 4294901760
        %827 = vmatmul.mubr.f32.gmra.mrb[0].mxu0 %v826
        %v828 = vpop.f32.mrb[0].mxu0
        %v829 = vadd.f32 %v708, %v828
        %v830 = vpop.f32.mrb[0].mxu0
        %v831 = vadd.f32 %v710, %v830
        %832 = vmatprep.mubr.f32.mxu0 0.0
        %v833 = vand.u32 %v253, 4294901760
        %834 = vmatmul.mubr.f32.gmra.mrb[0].mxu0 %v833
        %v835 = vpop.f32.mrb[0].mxu0
        %v836 = vadd.f32 %v717, %v835
        %v837 = vpop.f32.mrb[0].mxu0
        %v838 = vadd.f32 %v719, %v837
        %839 = vmatprep.mubr.f32.mxu0 0.0
        %v840 = vand.u32 %v256, 4294901760
        %841 = vmatmul.mubr.f32.gmra.mrb[0].mxu0 %v840
        %v842 = vpop.f32.mrb[0].mxu0
        %v843 = vadd.f32 %v726, %v842
        %v844 = vpop.f32.mrb[0].mxu0
        %v845 = vadd.f32 %v728, %v844
        %846 = vdwg.mxu0
        %v847 = vand.u32 %v214, 4294901760
        %848 = vmatprep.subr.mxu0 %v847
        %v849 = vand.u32 %v213, 4294901760
        %850 = vmatpush1.msra.mxu0 %v849
        %v851 = vand.u32 %v216, 4294901760
        %852 = vmatprep.subr.mxu0 %v851
        %v853 = vand.u32 %v215, 4294901760
        %854 = vmatpush1.msra.mxu0 %v853
        %v855 = vand.u32 %v218, 4294901760
        %856 = vmatprep.subr.mxu0 %v855
        %v857 = vand.u32 %v217, 4294901760
        %858 = vmatpush1.msra.mxu0 %v857
        %v859 = vand.u32 %v220, 4294901760
        %860 = vmatprep.subr.mxu0 %v859
        %v861 = vand.u32 %v219, 4294901760
        %862 = vmatpush1.msra.mxu0 %v861
        %863 = vmatprep.subr.mxu0 0.0
        %864 = vmatpush1.msra.mxu0 0.0
        %865 = vmatprep.subr.mxu0 0.0
        %866 = vmatpush1.msra.mxu0 0.0
        %867 = vmatprep.subr.mxu0 0.0
        %868 = vmatpush1.msra.mxu0 0.0
        %869 = vmatprep.subr.mxu0 0.0
        %870 = vmatpush1.msra.mxu0 0.0
        %871 = vmatprep.subr.mxu0 0.0
        %872 = vmatpush1.msra.mxu0 0.0
        %873 = vmatprep.subr.mxu0 0.0
        %874 = vmatpush1.msra.mxu0 0.0
        %875 = vmatprep.subr.mxu0 0.0
        %876 = vmatpush1.msra.mxu0 0.0
        %877 = vmatprep.subr.mxu0 0.0
        %878 = vmatpush1.msra.mxu0 0.0
        %879 = vmatprep.subr.mxu0 0.0
        %880 = vmatpush1.msra.mxu0 0.0
        %881 = vmatprep.subr.mxu0 0.0
        %882 = vmatpush1.msra.mxu0 0.0
        %883 = vmatprep.subr.mxu0 0.0
        %884 = vmatpush1.msra.mxu0 0.0
        %885 = vmatprep.subr.mxu0 0.0
        %886 = vmatpush1.msra.mxu0 0.0
        %887 = vmatprep.subr.mxu0 0.0
        %888 = vmatpush1.msra.mxu0 0.0
        %889 = vmatprep.subr.mxu0 0.0
        %890 = vmatpush1.msra.mxu0 0.0
        %891 = vmatprep.subr.mxu0 0.0
        %892 = vmatpush1.msra.mxu0 0.0
        %893 = vmatprep.subr.mxu0 0.0
        %894 = vmatpush1.msra.mxu0 0.0
        %895 = vmatprep.subr.mxu0 0.0
        %896 = vmatpush1.msra.mxu0 0.0
        %897 = vmatprep.subr.mxu0 0.0
        %898 = vmatpush1.msra.mxu0 0.0
        %899 = vmatprep.subr.mxu0 0.0
        %900 = vmatpush1.msra.mxu0 0.0
        %901 = vmatprep.subr.mxu0 0.0
        %902 = vmatpush1.msra.mxu0 0.0
        %903 = vmatprep.subr.mxu0 0.0
        %904 = vmatpush1.msra.mxu0 0.0
        %905 = vmatprep.subr.mxu0 0.0
        %906 = vmatpush1.msra.mxu0 0.0
        %907 = vmatprep.subr.mxu0 0.0
        %908 = vmatpush1.msra.mxu0 0.0
        %909 = vmatprep.subr.mxu0 0.0
        %910 = vmatpush1.msra.mxu0 0.0
        %911 = vmatprep.subr.mxu0 0.0
        %912 = vmatpush1.msra.mxu0 0.0
        %913 = vmatprep.subr.mxu0 0.0
        %914 = vmatpush1.msra.mxu0 0.0
        %915 = vmatprep.subr.mxu0 0.0
        %916 = vmatpush1.msra.mxu0 0.0
        %917 = vmatprep.subr.mxu0 0.0
        %918 = vmatpush1.msra.mxu0 0.0
        %919 = vmatprep.mubr.f32.mxu0 0.0
        %v920 = vand.u32 %v247, 4294901760
        %921 = vmatmul.mubr.f32.gmra.mrb[0].mxu0 %v920
        %v922 = vpop.f32.mrb[0].mxu0
        %v923 = vadd.f32 %v822, %v922
        %v924 = vpop.f32.mrb[0].mxu0
        %v925 = vadd.f32 %v824, %v924
        %926 = vmatprep.mubr.f32.mxu0 0.0
        %v927 = vand.u32 %v250, 4294901760
        %928 = vmatmul.mubr.f32.gmra.mrb[0].mxu0 %v927
        %v929 = vpop.f32.mrb[0].mxu0
        %v930 = vadd.f32 %v829, %v929
        %v931 = vpop.f32.mrb[0].mxu0
        %v932 = vadd.f32 %v831, %v931
        %933 = vmatprep.mubr.f32.mxu0 0.0
        %v934 = vand.u32 %v253, 4294901760
        %935 = vmatmul.mubr.f32.gmra.mrb[0].mxu0 %v934
        %v936 = vpop.f32.mrb[0].mxu0
        %v937 = vadd.f32 %v836, %v936
        %v938 = vpop.f32.mrb[0].mxu0
        %v939 = vadd.f32 %v838, %v938
        %940 = vmatprep.mubr.f32.mxu0 0.0
        %v941 = vand.u32 %v256, 4294901760
        %942 = vmatmul.mubr.f32.gmra.mrb[0].mxu0 %v941
        %v943 = vpop.f32.mrb[0].mxu0
        %v944 = vadd.f32 %v843, %v943
        %v945 = vpop.f32.mrb[0].mxu0
        %v946 = vadd.f32 %v845, %v945
        %947 = vdwg.mxu0
        %948 = vst [vmem:[%s206] sm:$0xff] %v923
        %949 = vst [vmem:[%s206 + $0x8] sm:$0xff] %v925
        %950 = vst [vmem:[%s206 + $0x10] sm:$0xff] %v930
        %951 = vst [vmem:[%s206 + $0x18] sm:$0xff] %v932
        %952 = vst [vmem:[%s206 + $0x20] sm:$0xff] %v937
        %953 = vst [vmem:[%s206 + $0x28] sm:$0xff] %v939
        %954 = vst [vmem:[%s206 + $0x30] sm:$0xff] %v944
        %955 = vst [vmem:[%s206 + $0x38] sm:$0xff] %v946
        %s956 = sand.u32 %s112, 1
        %s957 = scalar_lea.sflag [#allocation4], %s956
        %s958 = sand.u32 %s112, 1
        %s959 = smul.addr %s958, 64
        %s960 = scalar_lea.vmem [#allocation5], %s959
        // Predicated region
        $region37: #{tpu_custom_call.1} parent=31 // pred_check
          %p961 = pneg %p122
        $region38: #{tpu_custom_call.1} parent=31 // pred_check_branch
          %963 = sbr.rel (%p961) target = $region40
        $region39: #{tpu_custom_call.1} parent=31 // pred_region
          %s964 = smul.u32 2, %s25
          %s966 = ssub.s32 1024, 1024
          %967 = vsyncadd %s957, %s966
          %s968 = smul.addr %s24, 8
          %s969 = sadd.s32 %s964, %s968
          %s970 = smul.addr %s969, 128
          %s971 = scalar_lea.hbm %s3, %s970
          %s972 = sshll.u32 %s960, 4
          %s973 = int_to_ptr.vmem [resolvable:$true] %s972
          %978 = dma.vmem_to_hbm [thread:$0]  %s973, 1024, %s971, %s957, 256, 256, 16
        $region40: #{tpu_custom_call.1} parent=31 // pred_fallthru
          _
      $region32: #{tpu_custom_call.1} parent=5 // pred_fallthru
        _
      %p979 = scmp.le.s32.totalorder 2, %s15
      // Predicated region
      $region41: #{tpu_custom_call.1} parent=5 // pred_check
        %p980 = pneg %p979
      $region42: #{tpu_custom_call.1} parent=5 // pred_check_branch
        %982 = sbr.rel (%p980) target = $region44
      $region43: #{tpu_custom_call.1} parent=5 // pred_region
        %s983 = ssub.s32 %s15, 2
        // Predicated region
        $region45: #{tpu_custom_call.1} parent=43 // pred_check
          %p984 = pneg %p128
        $region46: #{tpu_custom_call.1} parent=43 // pred_check_branch
          %986 = sbr.rel (%p984) target = $region48
        $region47: #{tpu_custom_call.1} parent=43 // pred_region
          %s987 = sand.u32 %s113, 1
          %s988 = scalar_lea.sflag [#allocation4], %s987
          %s989 = sand.u32 %s113, 1
          %s990 = smul.addr %s989, 64
          %s991 = scalar_lea.vmem [#allocation5], %s990
          %992 = dma.done %s988, 1024
        $region48: #{tpu_custom_call.1} parent=43 // pred_fallthru
          _
      $region44: #{tpu_custom_call.1} parent=5 // pred_fallthru
        _
    $region6: #{tpu_custom_call.1} parent=1 // loop_footer
      %s19 = sadd.s32 1, %s15
    $region7: #{tpu_custom_call.1} parent=1 // loop_footer_branch
      %14 = sbr.rel target = $region3
    $region8: #{tpu_custom_call.1} parent=1 // loop_exit
      _
    %993 = vsyncpa [#allocation3], 1
    %s994 = scalar_lea.sflag [#allocation3], 1
    %995 = vsyncpa %s994, 1
    %996 = vsyncpa [#allocation4], 1
    %s997 = scalar_lea.sflag [#allocation4], 1
    %998 = vsyncpa %s997, 1

</llo_original>
